<compile_context>
chip_gen: v7x
topology: tpu7x:2x2x1
jax: 0.10.0
libtpu: 0.0.40
codegen_flags: <defaults>
</compile_context>

<pallas_src>
import functools
import math

import jax
import jax.numpy as jnp
from jax import lax
from jax.experimental import pallas as pl
from jax.experimental.pallas import tpu as pltpu


def _cdiv(a, b):
    return -(-a // b)


def _round_up(x, m):
    return ((x + m - 1) // m) * m


def _contract(x, w):
    # x: [tm, tk], w: [tn, tk]  ->  [tm, tn]  ==  x @ w.T on the MXU,
    # consuming the PyTorch [out_dim, in_dim] weight layout without ever
    # materializing w.T; output stays lane-dense on out_dim.
    return lax.dot_general(
        x,
        w,
        dimension_numbers=(((1,), (1,)), ((), ())),
        preferred_element_type=jnp.float32,
    )


def _accumulate(x_ref, w_ref, acc_ref, k_rem):
    """acc += x_tile @ w_tile.T, masking the K tail of the final k block.

    `k_rem` is a static Python int (K % tk).  When 0, no masking code is
    generated.  When non-zero, only the last k step pays one iota compare and
    two selects; this replaces the per-call jnp.pad HBM round trips that the
    previous version did in the wrapper.
    """
    if k_rem == 0:
        acc_ref[...] += _contract(x_ref[...], w_ref[...])
    else:
        k = pl.program_id(2)
        last = pl.num_programs(2) - 1

        @pl.when(k != last)
        def _():
            acc_ref[...] += _contract(x_ref[...], w_ref[...])

        @pl.when(k == last)
        def _():
            tk = x_ref.shape[-1]
            mask = lax.broadcasted_iota(jnp.int32, (1, tk), 1) < k_rem
            xv = x_ref[...]
            wv = w_ref[...]
            xv = jnp.where(mask, xv, jnp.zeros_like(xv))
            wv = jnp.where(mask, wv, jnp.zeros_like(wv))
            acc_ref[...] += _contract(xv, wv)


def _linear_kernel_f32_out(x_ref, w_ref, b_ref, o_ref, *, k_rem):
    # float32 output: accumulate directly into the VMEM-resident output block
    # (its block index is constant across k), saving the scratch buffer and
    # the final acc->out copy.
    k = pl.program_id(2)

    @pl.when(k == 0)
    def _():
        o_ref[...] = jnp.zeros_like(o_ref)

    _accumulate(x_ref, w_ref, o_ref, k_rem)

    @pl.when(k == pl.num_programs(2) - 1)
    def _():
        o_ref[...] += b_ref[...].astype(jnp.float32)


def _linear_kernel_acc_scratch(x_ref, w_ref, b_ref, o_ref, acc_ref, *, k_rem):
    # Non-f32 output (e.g. bf16): keep an f32 accumulator, cast exactly once.
    k = pl.program_id(2)

    @pl.when(k == 0)
    def _():
        acc_ref[...] = jnp.zeros_like(acc_ref)

    _accumulate(x_ref, w_ref, acc_ref, k_rem)

    @pl.when(k == pl.num_programs(2) - 1)
    def _():
        o_ref[...] = (acc_ref[...] + b_ref[...].astype(jnp.float32)).astype(o_ref.dtype)


def linear_layer_forward(h, weight, bias):
    """Pallas equivalent of nn.Linear(in_dim, out_dim)(h).

    h      : [..., in_dim]
    weight : [out_dim, in_dim]   (PyTorch convention, NOT pre-transposed)
    bias   : [out_dim]
    """
    K = h.shape[-1]            # in_dim
    N = weight.shape[0]        # out_dim
    lead_shape = h.shape[:-1]
    M = int(math.prod(lead_shape)) if lead_shape else 1

    # ---------------- tile selection ----------------
    # Big tiles for HBM reuse (review item 1/2). Blocks never exceed the array
    # dims: a dim smaller than the cap uses a single full-extent block (always
    # legal), larger dims use 512/256 blocks (8/128-aligned) with partial
    # boundary blocks handled by Pallas (OOB output writes discarded).
    TM_MAX = 512
    TN_MAX = 512
    TK_MAX = 512

    tm = M if M <= TM_MAX else TM_MAX

    if N <= 256:
        tn = N                      # single full-width block
    elif N % 512 == 0:
        tn = 512
    else:
        tn = 256                    # 256-wide feeds the full v6e/v7x MXU

    if K <= TK_MAX:
        tk = K                      # single full-depth block, no masking
    elif K % 512 == 0:
        tk = 512
    elif K % 256 == 0:
        tk = 256
    else:
        tk = 512                    # K tail masked in-kernel on last k step
    k_rem = K % tk                  # static; 0 when tk divides K (or tk == K)

    grid_m = _cdiv(M, tm)
    grid_n = _cdiv(N, tn)

    # Guarantee >= 2 blocks on the parallel axes so v7x's two TensorCores
    # both get work (review item: megacore utilisation).
    if grid_m * grid_n == 1:
        if tn >= 256:
            tn //= 2                # still a multiple of 128
        elif M > 8:
            tm = _round_up(_cdiv(M, 2), 8)
        grid_m = _cdiv(M, tm)
        grid_n = _cdiv(N, tn)

    grid_k = _cdiv(K, tk)
    grid = (grid_m, grid_n, grid_k)

    # ---------------- operands (no HBM padding copies) ----------------
    x2d = h.reshape(M, K)
    b2d = bias.reshape(1, N)
    out_dtype = h.dtype
    use_scratch = jnp.dtype(out_dtype) != jnp.dtype(jnp.float32)

    x_item = jnp.dtype(h.dtype).itemsize
    w_item = jnp.dtype(weight.dtype).itemsize
    b_item = jnp.dtype(bias.dtype).itemsize
    o_item = jnp.dtype(out_dtype).itemsize

    # ---------------- VMEM budget / compiler params ----------------
    footprint = (
        2 * tm * tk * x_item        # double-buffered x tiles
        + 2 * tn * tk * w_item      # double-buffered W tiles
        + 2 * tn * b_item           # bias tiles
        + 2 * tm * tn * o_item      # output block (+ writeback buffer)
        + (tm * tn * 4 if use_scratch else 0)
    )
    # Explicit limit: above the 16 MiB v5e scoped default when tiles are big,
    # capped at 48 MiB so it is always safe on v7x's 64 MiB physical VMEM.
    vmem_limit = int(min(48 * 2**20, max(footprint + (8 << 20), 16 << 20)))

    # CostEstimate reflecting actual streamed traffic: x is re-read once per
    # output-column block, W once per output-row block, output written once.
    cost = pl.CostEstimate(
        flops=2 * (grid_m * tm) * (grid_n * tn) * (grid_k * tk),
        transcendentals=0,
        bytes_accessed=int(
            grid_n * M * K * x_item
            + grid_m * N * K * w_item
            + grid_m * N * b_item
            + M * N * o_item
        ),
    )

    if use_scratch:
        kernel = functools.partial(_linear_kernel_acc_scratch, k_rem=k_rem)
        scratch_shapes = [pltpu.VMEM((tm, tn), jnp.float32)]
    else:
        kernel = functools.partial(_linear_kernel_f32_out, k_rem=k_rem)
        scratch_shapes = []

    out2d = pl.pallas_call(
        kernel,
        out_shape=jax.ShapeDtypeStruct((M, N), out_dtype),
        grid_spec=pltpu.PrefetchScalarGridSpec(
            num_scalar_prefetch=0,
            grid=grid,
            in_specs=[
                pl.BlockSpec((tm, tk), lambda i, j, k: (i, k)),   # x
                pl.BlockSpec((tn, tk), lambda i, j, k: (j, k)),   # W [N, K]
                pl.BlockSpec((1, tn), lambda i, j, k: (0, j)),    # bias
            ],
            out_specs=pl.BlockSpec((tm, tn), lambda i, j, k: (i, j)),
            scratch_shapes=scratch_shapes,
        ),
        compiler_params=pltpu.CompilerParams(
            dimension_semantics=("parallel", "parallel", "arbitrary"),
            vmem_limit_bytes=vmem_limit,
        ),
        cost_estimate=cost,
    )(x2d, weight, b2d)

    return out2d.reshape(*lead_shape, N)


if __name__ == "__main__":
    key = jax.random.PRNGKey(0)

    # ---- primary check: small shapes matching the module (h is (B, S, in_dim)) ----
    batch, seq, in_dim, out_dim, nhead = 2, 8, 32, 32, 4  # nhead unused by module
    k_h, k_w, k_b, k2_h, k2_w, k2_b = jax.random.split(key, 6)

    bound = 1.0 / math.sqrt(in_dim)
    weight = jax.random.uniform(
        k_w, (out_dim, in_dim), dtype=jnp.float32, minval=-bound, maxval=bound
    )
    bias = jax.random.uniform(
        k_b, (out_dim,), dtype=jnp.float32, minval=-bound, maxval=bound
    )
    h = jax.random.normal(k_h, (batch, seq, in_dim), dtype=jnp.float32)

    out = linear_layer_forward(h, weight, bias)
    out = jax.block_until_ready(out)
    ref = h @ weight.T + bias
    assert out.shape == (batch, seq, out_dim)
    assert jnp.allclose(out, ref, atol=1e-5, rtol=1e-5)

    # ---- secondary check: unaligned M/N and a K tail (exercises the in-kernel
    # mask and partial boundary blocks, replacing wrapper-side padding) ----
    b2, s2, in2, out2 = 2, 5, 520, 96
    bound2 = 1.0 / math.sqrt(in2)
    weight2 = jax.random.uniform(
        k2_w, (out2, in2), dtype=jnp.float32, minval=-bound2, maxval=bound2
    )
    bias2 = jax.random.uniform(
        k2_b, (out2,), dtype=jnp.float32, minval=-bound2, maxval=bound2
    )
    h2 = jax.random.normal(k2_h, (b2, s2, in2), dtype=jnp.float32)

    got2 = jax.block_until_ready(linear_layer_forward(h2, weight2, bias2))
    ref2 = h2 @ weight2.T + bias2
    assert got2.shape == (b2, s2, out2)
    assert jnp.allclose(got2, ref2, atol=1e-4, rtol=1e-4)

    print("KERNEL_OK")
</pallas_src>

<mosaic_0001>
module attributes {stable_mosaic.version = 11 : i64} {
  func.func @_linear_kernel_f32_out(%arg0: i32, %arg1: i32, %arg2: i32, %arg3: memref<8x32xf32, #tpu.memory_space<vmem>>, %arg4: memref<32x32xf32, #tpu.memory_space<vmem>>, %arg5: memref<1x32xf32, #tpu.memory_space<vmem>>, %arg6: memref<8x32xf32, #tpu.memory_space<vmem>>) attributes {dimension_semantics = [#tpu.dimension_semantics<parallel>, #tpu.dimension_semantics<parallel>, #tpu.dimension_semantics<arbitrary>], iteration_bounds = array<i64: 2, 1, 1>, scalar_prefetch = 0 : i64, scratch_operands = 0 : i64, tpu.core_type = #tpu.core_type<tc>, window_params = [{transform_indices = @transform_0, window_bounds = array<i64: 8, 32>}, {transform_indices = @transform_1, window_bounds = array<i64: 32, 32>}, {transform_indices = @transform_2, window_bounds = array<i64: 1, 32>}, {transform_indices = @transform_3, window_bounds = array<i64: 8, 32>}]} {
    %c0_i32 = arith.constant 0 : i32
    %0 = arith.cmpi eq, %arg2, %c0_i32 : i32
    %1 = arith.extui %0 : i1 to i32
    %c0_i32_0 = arith.constant 0 : i32
    %2 = arith.cmpi ne, %1, %c0_i32_0 : i32
    scf.if %2 {
      %cst_10 = arith.constant 0.000000e+00 : f32
      %12 = vector.broadcast %cst_10 : f32 to vector<8x32xf32>
      %c0_11 = arith.constant 0 : index
      %c0_12 = arith.constant 0 : index
      %13 = vector.load %arg6[%c0_11, %c0_12] : memref<8x32xf32, #tpu.memory_space<vmem>>, vector<8x32xf32>
      tpu.vector_store %arg6[%c0_11, %c0_12], %12 {strides = array<i32>} : memref<8x32xf32, #tpu.memory_space<vmem>>, vector<8x32xf32>,
    } else {
    }
    %c0 = arith.constant 0 : index
    %c0_1 = arith.constant 0 : index
    %3 = vector.load %arg6[%c0, %c0_1] : memref<8x32xf32, #tpu.memory_space<vmem>>, vector<8x32xf32>
    %c0_2 = arith.constant 0 : index
    %c0_3 = arith.constant 0 : index
    %4 = vector.load %arg3[%c0_2, %c0_3] : memref<8x32xf32, #tpu.memory_space<vmem>>, vector<8x32xf32>
    %c0_4 = arith.constant 0 : index
    %c0_5 = arith.constant 0 : index
    %5 = vector.load %arg4[%c0_4, %c0_5] : memref<32x32xf32, #tpu.memory_space<vmem>>, vector<32x32xf32>
    %cst = arith.constant dense<0.000000e+00> : vector<8x32xf32>
    %6 = tpu.matmul %4, %5, %cst {dimension_numbers = #tpu.dot_dimension_numbers<[1], [1], [0], [0], [0, 0, 1, 0], [], []>} : vector<8x32xf32>, vector<32x32xf32>, vector<8x32xf32> -> vector<8x32xf32>
    %7 = arith.addf %3, %6 : vector<8x32xf32>
    %c0_6 = arith.constant 0 : index
    %c0_7 = arith.constant 0 : index
    %8 = vector.load %arg6[%c0_6, %c0_7] : memref<8x32xf32, #tpu.memory_space<vmem>>, vector<8x32xf32>
    tpu.vector_store %arg6[%c0_6, %c0_7], %7 {strides = array<i32>} : memref<8x32xf32, #tpu.memory_space<vmem>>, vector<8x32xf32>,
    %c0_i32_8 = arith.constant 0 : i32
    %9 = arith.cmpi eq, %arg2, %c0_i32_8 : i32
    %10 = arith.extui %9 : i1 to i32
    %c0_i32_9 = arith.constant 0 : i32
    %11 = arith.cmpi ne, %10, %c0_i32_9 : i32
    scf.if %11 {
      %c0_10 = arith.constant 0 : index
      %c0_11 = arith.constant 0 : index
      %12 = vector.load %arg6[%c0_10, %c0_11] : memref<8x32xf32, #tpu.memory_space<vmem>>, vector<8x32xf32>
      %c0_12 = arith.constant 0 : index
      %c0_13 = arith.constant 0 : index
      %13 = vector.load %arg5[%c0_12, %c0_13] : memref<1x32xf32, #tpu.memory_space<vmem>>, vector<1x32xf32>
      %14 = vector.broadcast %13 : vector<1x32xf32> to vector<8x32xf32>
      %15 = arith.addf %12, %14 : vector<8x32xf32>
      %c0_14 = arith.constant 0 : index
      %c0_15 = arith.constant 0 : index
      %16 = vector.load %arg6[%c0_14, %c0_15] : memref<8x32xf32, #tpu.memory_space<vmem>>, vector<8x32xf32>
      tpu.vector_store %arg6[%c0_14, %c0_15], %15 {strides = array<i32>} : memref<8x32xf32, #tpu.memory_space<vmem>>, vector<8x32xf32>,
    } else {
    }
    return
  }
  func.func @transform_0(%arg0: i32, %arg1: i32, %arg2: i32) -> (i32, i32) {
    %c0_i32 = arith.constant 0 : i32
    return %arg0, %arg2 : i32, i32
  }
  func.func @transform_1(%arg0: i32, %arg1: i32, %arg2: i32) -> (i32, i32) {
    %c0_i32 = arith.constant 0 : i32
    return %arg1, %arg2 : i32, i32
  }
  func.func @transform_2(%arg0: i32, %arg1: i32, %arg2: i32) -> (i32, i32) {
    %c0_i32 = arith.constant 0 : i32
    %c0_i32_0 = arith.constant 0 : i32
    return %c0_i32, %arg1 : i32, i32
  }
  func.func @transform_3(%arg0: i32, %arg1: i32, %arg2: i32) -> (i32, i32) {
    %c0_i32 = arith.constant 0 : i32
    return %arg0, %arg1 : i32, i32
  }
}

</mosaic_0001>

<llo_original>
// kernel: tpu_custom_call.1
$region0: #{tpu_custom_call.1}
  #allocation0 [shape = 'u32[]', space=smem, size = 0x4, offset = 0x4, fixed_abs, tag = 'smem constant byte address 0x4 - core index']
  #allocation1 [shape = 'u32[144,128]{1,0:T(1,128)}', space=vmem, size = 0x12000, scoped, tag = 'internal scratch']
  %s0 = inlined_call_operand.hbm [shape: f32[16,32], index: 0, kind: input, shape index: {}]
  %s1 = inlined_call_operand.hbm [shape: f32[32,32], index: 1, kind: input, shape index: {}]
  %s2 = inlined_call_operand.vmem [shape: f32[1,32], index: 2, kind: input, shape index: {}]
  %s3 = inlined_call_operand.hbm [shape: f32[16,32], index: 3, kind: output, shape index: {}]
  %s4 = sld [smem:[#allocation0]]
  $region61: #{tpu_custom_call.1} parent=0
    _
  %s6 = ssub.s32 1, %s4
  %s7 = scalar_select 0, %s6, %s4
  $region1: #{tpu_custom_call.1} parent=0
    #allocation2 [shape = 'u8[8192]{0}', space=vmem, size = 0x2000, scoped, tag = 'input window, operand 0']
    #allocation3 [shape = 's32[2]{0}', space=sflag, size = 0x8, scoped, tag = 'scoped memory for tpu_custom_call.1']
    #allocation4 [shape = 's32[2]{0}', space=sflag, size = 0x8, scoped, tag = 'scoped memory for tpu_custom_call.1']
    #allocation5 [shape = 'u8[16384]{0}', space=vmem, size = 0x4000, scoped, tag = 'input window, operand 1, single buffered']
    #allocation6 [shape = 's32[1]{0}', space=sflag, size = 0x4, scoped, tag = 'scoped memory for tpu_custom_call.1']
    #allocation7 [shape = 'u8[8192]{0}', space=vmem, size = 0x2000, scoped, tag = 'output window, operand 0']
    %8 = vsyncpa [#allocation3], 0
    %s9 = scalar_lea.sflag [#allocation3], 1
    %10 = vsyncpa %s9, 0
    %11 = vsyncpa [#allocation6], 0
    %12 = vsyncpa [#allocation4], 0
    %s13 = scalar_lea.sflag [#allocation4], 1
    %14 = vsyncpa %s13, 0
    loop: start=0, step=1, limit=4
    $region2: #{tpu_custom_call.1} parent=1 // loop_pre_header
      _
    $region3: #{tpu_custom_call.1} parent=1 // loop_header
      %s16 = sphi 0, %s20
      %p17 = scmp.ge.s32.totalorder %s16, 4
      %s23 = sphi 0, %s42
      %s24 = sphi 0, %s38
      %s25 = sphi 0, %s34
      %s26 = sphi 0, %s23
      %s27 = sphi 0, %s24
      %s28 = sphi 0, %s25
      %s29 = sphi 0, %s26
      %s30 = sphi 0, %s27
      %s31 = sphi 0, %s28
      %s47 = sphi 0, %s49
      %s50 = sphi 0, %s47
      %s51 = sphi 0, %s50
      %s67 = sphi 0, %s51
      %s75 = sphi 0, %s77
      %s78 = sphi 0, %s75
      %s79 = sphi 0, %s78
      %s95 = sphi 0, %s79
      %s101 = sphi 0, %s103
      %s104 = sphi 0, %s101
      %s105 = sphi 0, %s104
      %s121 = sphi 0, %s105
      %s129 = sphi 0, %s131
      %s132 = sphi 0, %s129
      %s133 = sphi 0, %s132
      %s149 = sphi 0, %s133
    $region4: #{tpu_custom_call.1} parent=1 // loop_header_branch
      %19 = sbr.rel (%p17) target = $region8
    $region5: #{tpu_custom_call.1} parent=1 // loop_body
      %s21 = ssub.s32 %s16, 1
      %s22 = ssub.s32 %s16, 2
      %s32 = sadd.s32 1, %s25
      %p33 = scmp.ge.s32.totalorder %s32, 1
      %s34 = scalar_select %p33, 0, %s32
      %s35 = sadd.s32 1, %s24
      %s36 = scalar_select %p33, %s35, %s24
      %p37 = scmp.ge.s32.totalorder %s36, 1
      %s38 = scalar_select %p37, 0, %s36
      %s39 = sadd.s32 1, %s23
      %s40 = scalar_select %p37, %s39, %s23
      %p41 = scmp.ge.s32.totalorder %s40, 2
      %s42 = scalar_select %p41, 0, %s40
      %s43 = ssub.s32 %s23, %s42
      %s44 = ssub.s32 %s25, %s34
      %s45 = sor.u32 %s43, %s44
      %p46 = scmp.eq.s32.totalorder %s45, 0
      %s48 = sadd.s32 %s47, 1
      %s49 = scalar_select %p46, %s47, %s48
      %p52 = pneg %p46
      %p53 = scmp.eq.s32.totalorder %s16, 1
      %p54 = por %p52, %p53
      %p55 = scmp.ne.s32.totalorder %s47, %s50
      %p56 = scmp.eq.s32.totalorder %s16, 0
      %p57 = por %p55, %p56
      %p58 = scmp.ne.s32.totalorder %s47, %s50
      %p59 = scmp.eq.s32.totalorder %s21, 1
      %p60 = por %p58, %p59
      %p61 = scmp.ne.s32.totalorder %s50, %s51
      %p62 = scmp.eq.s32.totalorder %s21, 0
      %p63 = por %p61, %p62
      %p64 = scmp.ne.s32.totalorder %s50, %s51
      %p65 = scmp.eq.s32.totalorder %s22, 1
      %p66 = por %p64, %p65
      %p68 = scmp.ne.s32.totalorder %s51, %s67
      %p69 = scmp.eq.s32.totalorder %s22, 0
      %p70 = por %p68, %p69
      %s71 = ssub.s32 %s24, %s38
      %s72 = ssub.s32 %s25, %s34
      %s73 = sor.u32 %s71, %s72
      %p74 = scmp.eq.s32.totalorder %s73, 0
      %s76 = sadd.s32 %s75, 1
      %s77 = scalar_select %p74, %s75, %s76
      %p80 = pneg %p74
      %p81 = scmp.eq.s32.totalorder %s16, 1
      %p82 = por %p80, %p81
      %p83 = scmp.ne.s32.totalorder %s75, %s78
      %p84 = scmp.eq.s32.totalorder %s16, 0
      %p85 = por %p83, %p84
      %p86 = scmp.ne.s32.totalorder %s75, %s78
      %p87 = scmp.eq.s32.totalorder %s21, 1
      %p88 = por %p86, %p87
      %p89 = scmp.ne.s32.totalorder %s78, %s79
      %p90 = scmp.eq.s32.totalorder %s21, 0
      %p91 = por %p89, %p90
      %p92 = scmp.ne.s32.totalorder %s78, %s79
      %p93 = scmp.eq.s32.totalorder %s22, 1
      %p94 = por %p92, %p93
      %p96 = scmp.ne.s32.totalorder %s79, %s95
      %p97 = scmp.eq.s32.totalorder %s22, 0
      %p98 = por %p96, %p97
      %s99 = ssub.s32 %s24, %s38
      %p100 = scmp.eq.s32.totalorder %s99, 0
      %s102 = sadd.s32 %s101, 1
      %s103 = scalar_select %p100, %s101, %s102
      %p106 = pneg %p100
      %p107 = scmp.eq.s32.totalorder %s16, 1
      %p108 = por %p106, %p107
      %p109 = scmp.ne.s32.totalorder %s101, %s104
      %p110 = scmp.eq.s32.totalorder %s16, 0
      %p111 = por %p109, %p110
      %p112 = scmp.ne.s32.totalorder %s101, %s104
      %p113 = scmp.eq.s32.totalorder %s21, 1
      %p114 = por %p112, %p113
      %p115 = scmp.ne.s32.totalorder %s104, %s105
      %p116 = scmp.eq.s32.totalorder %s21, 0
      %p117 = por %p115, %p116
      %p118 = scmp.ne.s32.totalorder %s104, %s105
      %p119 = scmp.eq.s32.totalorder %s22, 1
      %p120 = por %p118, %p119
      %p122 = scmp.ne.s32.totalorder %s105, %s121
      %p123 = scmp.eq.s32.totalorder %s22, 0
      %p124 = por %p122, %p123
      %s125 = ssub.s32 %s23, %s42
      %s126 = ssub.s32 %s24, %s38
      %s127 = sor.u32 %s125, %s126
      %p128 = scmp.eq.s32.totalorder %s127, 0
      %s130 = sadd.s32 %s129, 1
      %s131 = scalar_select %p128, %s129, %s130
      %p134 = pneg %p128
      %p135 = scmp.eq.s32.totalorder %s16, 1
      %p136 = por %p134, %p135
      %p137 = scmp.ne.s32.totalorder %s129, %s132
      %p138 = scmp.eq.s32.totalorder %s16, 0
      %p139 = por %p137, %p138
      %p140 = scmp.ne.s32.totalorder %s129, %s132
      %p141 = scmp.eq.s32.totalorder %s21, 1
      %p142 = por %p140, %p141
      %p143 = scmp.ne.s32.totalorder %s132, %s133
      %p144 = scmp.eq.s32.totalorder %s21, 0
      %p145 = por %p143, %p144
      %p146 = scmp.ne.s32.totalorder %s132, %s133
      %p147 = scmp.eq.s32.totalorder %s22, 1
      %p148 = por %p146, %p147
      %p150 = scmp.ne.s32.totalorder %s133, %s149
      %p151 = scmp.eq.s32.totalorder %s22, 0
      %p152 = por %p150, %p151
      %p153 = scmp.le.s32.totalorder 1, %s16
      %p154 = scmp.lt.s32.totalorder %s16, 3
      %p155 = pnand %p153, %p154
      %p156 = pneg %p155
      // Predicated region
      $region9: #{tpu_custom_call.1} parent=5 // pred_check
        _
      $region10: #{tpu_custom_call.1} parent=5 // pred_check_branch
        %158 = sbr.rel (%p155) target = $region12
      $region11: #{tpu_custom_call.1} parent=5 // pred_region
        %s159 = ssub.s32 %s16, 1
        // Predicated region
        $region13: #{tpu_custom_call.1} parent=11 // pred_check
          %p160 = pneg %p91
        $region14: #{tpu_custom_call.1} parent=11 // pred_check_branch
          %162 = sbr.rel (%p160) target = $region16
        $region15: #{tpu_custom_call.1} parent=11 // pred_region
          %s163 = smul.u32 4, %s27
          %s165 = ssub.s32 512, 512
          %166 = vsyncadd [#allocation6], %s165
          %s167 = sadd.s32 %s28, %s163
          %s168 = smul.addr %s167, 128
          %s169 = scalar_lea.hbm %s1, %s168
          %s170 = sshll.u32 [#allocation5], 4
          %s171 = int_to_ptr.vmem [resolvable:$true] %s170
          %176 = dma.hbm_to_vmem [thread:$0]  %s169, 512, %s171, [#allocation6], 128, 128, 8
        $region16: #{tpu_custom_call.1} parent=11 // pred_fallthru
          _
        // Predicated region
        $region17: #{tpu_custom_call.1} parent=11 // pred_check
          %p177 = pneg %p117
        $region18: #{tpu_custom_call.1} parent=11 // pred_check_branch
          %179 = sbr.rel (%p177) target = $region20
        $region19: #{tpu_custom_call.1} parent=11 // pred_region
          %p180 = scmp.lt.s32.totalorder %s27, 0
          %s181 = scalar_select %p180, %s27, 0
          %s182 = scalar_lea.vmem %s2, %s181
        $region20: #{tpu_custom_call.1} parent=11 // pred_fallthru
          _
      $region12: #{tpu_custom_call.1} parent=5 // pred_fallthru
        _
      %p183 = scmp.lt.s32.totalorder %s16, 2
      // Predicated region
      $region21: #{tpu_custom_call.1} parent=5 // pred_check
        %p184 = pneg %p183
      $region22: #{tpu_custom_call.1} parent=5 // pred_check_branch
        %186 = sbr.rel (%p184) target = $region24
      $region23: #{tpu_custom_call.1} parent=5 // pred_region
        // Predicated region
        $region25: #{tpu_custom_call.1} parent=23 // pred_check
          %p187 = pneg %p57
        $region26: #{tpu_custom_call.1} parent=23 // pred_check_branch
          %189 = sbr.rel (%p187) target = $region28
        $region27: #{tpu_custom_call.1} parent=23 // pred_region
          %s190 = sand.u32 %s47, 1
          %s191 = scalar_lea.sflag [#allocation3], %s190
          %s192 = sand.u32 %s47, 1
          %s193 = smul.addr %s192, 8
          %s194 = scalar_lea.vmem [#allocation2], %s193
          %s196 = ssub.s32 128, 128
          %197 = vsyncadd %s191, %s196
          %s198 = sadd.s32 %s25, %s23
          %s199 = smul.addr %s198, 128
          %s200 = scalar_lea.hbm %s0, %s199
          %s202 = sshll.u32 %s194, 4
          %s203 = int_to_ptr.vmem [resolvable:$true] %s202
          %205 = dma.hbm_to_vmem [thread:$0]  %s200, 128, %s203, %s191
        $region28: #{tpu_custom_call.1} parent=23 // pred_fallthru
          _
      $region24: #{tpu_custom_call.1} parent=5 // pred_fallthru
        _
      %p206 = scmp.le.s32.totalorder 1, %s16
      %p207 = scmp.lt.s32.totalorder %s16, 3
      %p208 = pnand %p206, %p207
      %p209 = pneg %p208
      // Predicated region
      $region29: #{tpu_custom_call.1} parent=5 // pred_check
        _
      $region30: #{tpu_custom_call.1} parent=5 // pred_check_branch
        %211 = sbr.rel (%p208) target = $region32
      $region31: #{tpu_custom_call.1} parent=5 // pred_region
        %s212 = ssub.s32 %s16, 1
        %s213 = sand.u32 %s50, 1
        %s214 = scalar_lea.sflag [#allocation3], %s213
        %s215 = sand.u32 %s50, 1
        %s216 = smul.addr %s215, 8
        %s217 = scalar_lea.vmem [#allocation2], %s216
        // Predicated region
        $region33: #{tpu_custom_call.1} parent=31 // pred_check
          %p218 = pneg %p63
        $region34: #{tpu_custom_call.1} parent=31 // pred_check_branch
          %220 = sbr.rel (%p218) target = $region36
        $region35: #{tpu_custom_call.1} parent=31 // pred_region
          %221 = dma.done %s214, 128
        $region36: #{tpu_custom_call.1} parent=31 // pred_fallthru
          _
        // Predicated region
        $region37: #{tpu_custom_call.1} parent=31 // pred_check
          %p222 = pneg %p91
        $region38: #{tpu_custom_call.1} parent=31 // pred_check_branch
          %224 = sbr.rel (%p222) target = $region40
        $region39: #{tpu_custom_call.1} parent=31 // pred_region
          %225 = dma.done [#allocation6], 512
        $region40: #{tpu_custom_call.1} parent=31 // pred_fallthru
          _
        %s226 = sand.u32 %s50, 1
        %s227 = scalar_lea.sflag [#allocation3], %s226
        %s228 = sand.u32 %s50, 1
        %s229 = smul.addr %s228, 8
        %s230 = scalar_lea.vmem [#allocation2], %s229
        %p231 = pneg %p63
        %p232 = pneg %p60
        %p233 = pneg %p91
        %p234 = pneg %p88
        %p235 = scmp.lt.s32.totalorder %s27, 0
        %s236 = scalar_select %p235, %s27, 0
        %s237 = scalar_lea.vmem %s2, %s236
        %p238 = pneg %p117
        %p239 = pneg %p114
        %p240 = pneg %p145
        %p241 = pneg %p142
        %s242 = sand.u32 %s132, 1
        %s243 = scalar_lea.sflag [#allocation4], %s242
        %s244 = sand.u32 %s132, 1
        %s245 = smul.addr %s244, 8
        %s246 = scalar_lea.vmem [#allocation7], %s245
        %s247 = smul.u32 4, %s27
        %p248 = scmp.lt.s32.totalorder %s27, 0
        %s249 = scalar_select %p248, %s27, 0
        %s250 = scalar_lea.vmem %s2, %s249
        %p251 = scmp.eq.s32.totalorder %s28, 0
        // Predicated region
        $region41: #{tpu_custom_call.1} parent=31 // pred_check
          %p252 = pneg %p251
        $region42: #{tpu_custom_call.1} parent=31 // pred_check_branch
          %254 = sbr.rel (%p252) target = $region44
        $region43: #{tpu_custom_call.1} parent=31 // pred_region
          %vm255 = vcmask 261120
          %256 = vst.msk [vmem:[%s246] sm:$0xff] %vm255, 0.0
        $region44: #{tpu_custom_call.1} parent=31 // pred_fallthru
          _
        %v257 = vld [vmem:[%s246] sm:$0xff]
        %v258 = vld [vmem:[%s217] sm:$0xff]
        %v259 = vld [vmem:[#allocation5] sm:$0xff]
        %v260 = vld [vmem:[#allocation5 + $0x8] sm:$0xff]
        %v261 = vld [vmem:[#allocation5 + $0x10] sm:$0xff]
        %v262 = vld [vmem:[#allocation5 + $0x18] sm:$0xff]
        %vm263 = vcmask 261120
        %v265 = vsel %vm263, %v258, 0
        %v268 = vsel %vm263, %v259, 0
        %v271 = vsel %vm263, %v260, 0
        %v274 = vsel %vm263, %v261, 0
        %v277 = vsel %vm263, %v262, 0
        %279 = vmatprep.subr.mxu0 0.0
        %280 = vmatpush1.xpose.msra.mxu0 %v268
        %281 = vmatprep.subr.mxu0 0.0
        %282 = vmatpush1.xpose.msra.mxu0 %v271
        %283 = vmatprep.subr.mxu0 0.0
        %284 = vmatpush1.xpose.msra.mxu0 %v274
        %285 = vmatprep.subr.mxu0 0.0
        %286 = vmatpush1.xpose.msra.mxu0 %v277
        %287 = vmatprep.subr.mxu0 0.0
        %288 = vmatpush1.xpose.msra.mxu0 0.0
        %289 = vmatprep.subr.mxu0 0.0
        %290 = vmatpush1.xpose.msra.mxu0 0.0
        %291 = vmatprep.subr.mxu0 0.0
        %292 = vmatpush1.xpose.msra.mxu0 0.0
        %293 = vmatprep.subr.mxu0 0.0
        %294 = vmatpush1.xpose.msra.mxu0 0.0
        %295 = vmatprep.subr.mxu0 0.0
        %296 = vmatpush1.xpose.msra.mxu0 0.0
        %297 = vmatprep.subr.mxu0 0.0
        %298 = vmatpush1.xpose.msra.mxu0 0.0
        %299 = vmatprep.subr.mxu0 0.0
        %300 = vmatpush1.xpose.msra.mxu0 0.0
        %301 = vmatprep.subr.mxu0 0.0
        %302 = vmatpush1.xpose.msra.mxu0 0.0
        %303 = vmatprep.subr.mxu0 0.0
        %304 = vmatpush1.xpose.msra.mxu0 0.0
        %305 = vmatprep.subr.mxu0 0.0
        %306 = vmatpush1.xpose.msra.mxu0 0.0
        %307 = vmatprep.subr.mxu0 0.0
        %308 = vmatpush1.xpose.msra.mxu0 0.0
        %309 = vmatprep.subr.mxu0 0.0
        %310 = vmatpush1.xpose.msra.mxu0 0.0
        %311 = vmatprep.subr.mxu0 0.0
        %312 = vmatpush1.xpose.msra.mxu0 0.0
        %313 = vmatprep.subr.mxu0 0.0
        %314 = vmatpush1.xpose.msra.mxu0 0.0
        %315 = vmatprep.subr.mxu0 0.0
        %316 = vmatpush1.xpose.msra.mxu0 0.0
        %317 = vmatprep.subr.mxu0 0.0
        %318 = vmatpush1.xpose.msra.mxu0 0.0
        %319 = vmatprep.subr.mxu0 0.0
        %320 = vmatpush1.xpose.msra.mxu0 0.0
        %321 = vmatprep.subr.mxu0 0.0
        %322 = vmatpush1.xpose.msra.mxu0 0.0
        %323 = vmatprep.subr.mxu0 0.0
        %324 = vmatpush1.xpose.msra.mxu0 0.0
        %325 = vmatprep.subr.mxu0 0.0
        %326 = vmatpush1.xpose.msra.mxu0 0.0
        %327 = vmatprep.subr.mxu0 0.0
        %328 = vmatpush1.xpose.msra.mxu0 0.0
        %329 = vmatprep.subr.mxu0 0.0
        %330 = vmatpush1.xpose.msra.mxu0 0.0
        %331 = vmatprep.subr.mxu0 0.0
        %332 = vmatpush1.xpose.msra.mxu0 0.0
        %333 = vmatprep.subr.mxu0 0.0
        %334 = vmatpush1.xpose.msra.mxu0 0.0
        %335 = vmatprep.subr.mxu0 0.0
        %336 = vmatpush1.xpose.msra.mxu0 0.0
        %337 = vmatprep.subr.mxu0 0.0
        %338 = vmatpush1.xpose.msra.mxu0 0.0
        %339 = vmatprep.subr.mxu0 0.0
        %340 = vmatpush1.xpose.msra.mxu0 0.0
        %341 = vmatprep.subr.mxu0 0.0
        %342 = vmatpush1.xpose.msra.mxu0 0.0
        %343 = vmatprep.mubr.f32.mxu0 0.0
        %344 = vmatmul.mubr.f32.gmra.mrb[0].mxu0 %v265
        %v345 = vpop.f32.mrb[0].mxu0
        %v346 = vadd.f32 0.0, %v345
        %v347 = vpop.f32.mrb[0].mxu0
        %348 = vdwg.mxu0
        %v349 = vadd.f32 %v257, %v346
        %350 = vst.msk [vmem:[%s246] sm:$0xff] %vm263, %v349
        // Predicated region
        $region45: #{tpu_custom_call.1} parent=31 // pred_check
          %p351 = pneg %p251
        $region46: #{tpu_custom_call.1} parent=31 // pred_check_branch
          %353 = sbr.rel (%p351) target = $region48
        $region47: #{tpu_custom_call.1} parent=31 // pred_region
          %v354 = vld [vmem:[%s246] sm:$0xff]
          %v355 = vld [vmem:[%s250] sm:$0x1]
          %v357 = vlaneseq
          %v358 = vshrl.u32 %v357, 7
          %v359 = vsub.s32 0, %v358
          %v360 = vrot.slane %v355, %v359
          %v362 = vadd.f32 %v354, %v360
          %363 = vst.msk [vmem:[%s246] sm:$0xff] %vm263, %v362
        $region48: #{tpu_custom_call.1} parent=31 // pred_fallthru
          _
        %s364 = sand.u32 %s132, 1
        %s365 = scalar_lea.sflag [#allocation4], %s364
        %s366 = sand.u32 %s132, 1
        %s367 = smul.addr %s366, 8
        %s368 = scalar_lea.vmem [#allocation7], %s367
        // Predicated region
        $region49: #{tpu_custom_call.1} parent=31 // pred_check
          %p369 = pneg %p142
        $region50: #{tpu_custom_call.1} parent=31 // pred_check_branch
          %371 = sbr.rel (%p369) target = $region52
        $region51: #{tpu_custom_call.1} parent=31 // pred_region
          %s373 = ssub.s32 128, 128
          %374 = vsyncadd %s365, %s373
          %s375 = sadd.s32 %s27, %s26
          %s376 = smul.addr %s375, 128
          %s377 = scalar_lea.hbm %s3, %s376
          %s379 = sshll.u32 %s368, 4
          %s380 = int_to_ptr.vmem [resolvable:$true] %s379
          %382 = dma.vmem_to_hbm [thread:$0]  %s380, 128, %s377, %s365
        $region52: #{tpu_custom_call.1} parent=31 // pred_fallthru
          _
      $region32: #{tpu_custom_call.1} parent=5 // pred_fallthru
        _
      %p383 = scmp.le.s32.totalorder 2, %s16
      // Predicated region
      $region53: #{tpu_custom_call.1} parent=5 // pred_check
        %p384 = pneg %p383
      $region54: #{tpu_custom_call.1} parent=5 // pred_check_branch
        %386 = sbr.rel (%p384) target = $region56
      $region55: #{tpu_custom_call.1} parent=5 // pred_region
        %s387 = ssub.s32 %s16, 2
        // Predicated region
        $region57: #{tpu_custom_call.1} parent=55 // pred_check
          %p388 = pneg %p148
        $region58: #{tpu_custom_call.1} parent=55 // pred_check_branch
          %390 = sbr.rel (%p388) target = $region60
        $region59: #{tpu_custom_call.1} parent=55 // pred_region
          %s391 = sand.u32 %s133, 1
          %s392 = scalar_lea.sflag [#allocation4], %s391
          %s393 = sand.u32 %s133, 1
          %s394 = smul.addr %s393, 8
          %s395 = scalar_lea.vmem [#allocation7], %s394
          %396 = dma.done %s392, 128
        $region60: #{tpu_custom_call.1} parent=55 // pred_fallthru
          _
      $region56: #{tpu_custom_call.1} parent=5 // pred_fallthru
        _
    $region6: #{tpu_custom_call.1} parent=1 // loop_footer
      %s20 = sadd.s32 1, %s16
    $region7: #{tpu_custom_call.1} parent=1 // loop_footer_branch
      %15 = sbr.rel target = $region3
    $region8: #{tpu_custom_call.1} parent=1 // loop_exit
      _
    %397 = vsyncpa [#allocation3], 1
    %s398 = scalar_lea.sflag [#allocation3], 1
    %399 = vsyncpa %s398, 1
    %400 = vsyncpa [#allocation6], 1
    %401 = vsyncpa [#allocation4], 1
    %s402 = scalar_lea.sflag [#allocation4], 1
    %403 = vsyncpa %s402, 1

</llo_original>
